<compile_context>
chip_gen: v5e
topology: v5e:2x2
jax: 0.10.0
libtpu: 0.0.40
codegen_flags: <defaults>
</compile_context>

<pallas_src>
import functools

import jax
import jax.numpy as jnp
from jax.experimental import pallas as pl
from jax.experimental.pallas import tpu as pltpu


# --------------------------------------------------------------------------- #
# Pass 1: tiled global-average-pool (sum) over the spatial (lane) dimension.
# Grid = (n_bc, n_hw); hw is the reduction ("arbitrary") axis, last by convention.
# --------------------------------------------------------------------------- #
def _pool_kernel(xr_ref, xi_ref, sr_ref, si_ref, *, hw, lane_tile):
    h = pl.program_id(1)

    @pl.when(h == 0)
    def _init():
        sr_ref[...] = jnp.zeros_like(sr_ref)
        si_ref[...] = jnp.zeros_like(si_ref)

    # Mask the ragged spatial tail in-kernel (no HBM-side padding copies).
    lane = jax.lax.broadcasted_iota(jnp.int32, xr_ref.shape, 1)
    valid = lane < (hw - h * lane_tile)
    xr = jnp.where(valid, xr_ref[...], 0.0)
    xi = jnp.where(valid, xi_ref[...], 0.0)

    # Per-tile cross-lane reduce accumulated straight into the resident output
    # block: the XLU slot is idle in an HBM-bound stream, so this is free and
    # it removes the big lane-form scratch accumulators entirely.
    sr_ref[...] += jnp.sum(xr, axis=-1, keepdims=True)
    si_ref[...] += jnp.sum(xi, axis=-1, keepdims=True)


# --------------------------------------------------------------------------- #
# Pass 2: tiled elementwise complex multiply by the per-(b,c) mask.
# Mask blocks are (Sb, 1): broadcast over lanes is a cheap splat.
# --------------------------------------------------------------------------- #
def _apply_kernel(xr_ref, xi_ref, mr_ref, mi_ref, or_ref, oi_ref):
    xr = xr_ref[...]
    xi = xi_ref[...]
    mr = mr_ref[...]            # (Sb, 1) -> lane broadcast
    mi = mi_ref[...]
    or_ref[...] = xr * mr - xi * mi
    oi_ref[...] = xr * mi + xi * mr


# --------------------------------------------------------------------------- #
# Tile sizing: byte-based (~2 MiB / streaming buffer), (8, 128)-dense blocks.
# --------------------------------------------------------------------------- #
_LANE = 128
_SUB = 8
_TARGET_BYTES = 2 * 1024 * 1024      # per streaming buffer; v7x-safe
_VMEM_LIMIT = 48 * 1024 * 1024       # > v5e 16 MiB default, < v7x 64 MiB physical


def _round_up(x, m):
    return -(-x // m) * m


def _tile_sizes(bc, hw):
    hw128 = _round_up(hw, _LANE)
    # Lane tile: lane-dense, capped so an 8-row tile still fits the byte budget.
    t_budget = max(_LANE, (_TARGET_BYTES // (_SUB * 4)) // _LANE * _LANE)
    t = min(hw128, t_budget)
    # Sublane tile: fill the remaining byte budget, multiple of 8 (or the full
    # extent when bc < 8, which satisfies the (8, 128) block rule).
    if bc < _SUB:
        sb = bc
    else:
        sb_budget = max(_SUB, (_TARGET_BYTES // (t * 4)) // _SUB * _SUB)
        sb = min(sb_budget, (bc // _SUB) * _SUB)
    return sb, t


# --------------------------------------------------------------------------- #
# Wrapper
# --------------------------------------------------------------------------- #
@jax.jit
def cv_masked_channel_attention(xr, xi, params):
    """xr, xi: (B, C, H, W) float32. Returns (out_r, out_i) with same shape."""
    wdr, wdi, bdr, bdi, wur, wui, bur, bui = params
    B, C, H, W = xr.shape
    hw = H * W
    bc = B * C

    sb, t = _tile_sizes(bc, hw)
    n_bc = pl.cdiv(bc, sb)
    n_hw = pl.cdiv(hw, t)

    # Free (metadata-only) reshapes: no HBM copies, no padding.
    xr_f = xr.reshape(bc, hw)
    xi_f = xi.reshape(bc, hw)

    # ---------------- pass 1: pooled sums over spatial dims -> (bc, 1) -------
    pool_cost = pl.CostEstimate(
        flops=2 * bc * hw,
        transcendentals=0,
        bytes_accessed=2 * bc * hw * 4 + 2 * bc * 4,
    )
    sum_r, sum_i = pl.pallas_call(
        functools.partial(_pool_kernel, hw=hw, lane_tile=t),
        out_shape=(jax.ShapeDtypeStruct((bc, 1), jnp.float32),
                   jax.ShapeDtypeStruct((bc, 1), jnp.float32)),
        grid=(n_bc, n_hw),
        in_specs=[pl.BlockSpec((sb, t), lambda i, h: (i, h)),
                  pl.BlockSpec((sb, t), lambda i, h: (i, h))],
        out_specs=(pl.BlockSpec((sb, 1), lambda i, h: (i, 0)),
                   pl.BlockSpec((sb, 1), lambda i, h: (i, 0))),
        compiler_params=pltpu.CompilerParams(
            dimension_semantics=("parallel", "arbitrary"),
            vmem_limit_bytes=_VMEM_LIMIT),
        cost_estimate=pool_cost,
    )(xr_f, xi_f)

    # ---------------- tiny (B, C) channel-attention math: plain JAX ----------
    # (B,C)x(C,C/r) GEMMs would pad to full MXU tiles with ~0% utilization;
    # keeping them outside the kernels frees VMEM for the streaming tiles.
    inv_hw = 1.0 / hw
    pr = sum_r.reshape(B, C) * inv_hw
    pim = sum_i.reshape(B, C) * inv_hw

    # conv_down (complex 1x1 conv == complex matmul, C -> C/r) + CReLU
    dr = pr @ wdr.T - pim @ wdi.T + bdr
    di = pr @ wdi.T + pim @ wdr.T + bdi
    dr = jnp.maximum(dr, 0.0)
    di = jnp.maximum(di, 0.0)

    # conv_up (C/r -> C)
    ar = dr @ wur.T - di @ wui.T + bur
    ai = dr @ wui.T + di @ wur.T + bui

    # ComplexRatioMask: sigmoid(|a|) * a / |a|.  Eps-guarded rsqrt: returns 0
    # at |a| == 0 (reference would be NaN) — deliberate, safer deviation.
    m2 = ar * ar + ai * ai
    mag = jnp.sqrt(m2)
    scale = jax.nn.sigmoid(mag) * jax.lax.rsqrt(jnp.maximum(m2, 1e-24))
    mask_r = (ar * scale).astype(jnp.float32).reshape(bc, 1)
    mask_i = (ai * scale).astype(jnp.float32).reshape(bc, 1)

    # ---------------- pass 2: out = z * mask (streaming, tiled) --------------
    apply_cost = pl.CostEstimate(
        flops=6 * bc * hw,
        transcendentals=0,
        bytes_accessed=4 * bc * hw * 4 + 2 * bc * 4,
    )
    out_r, out_i = pl.pallas_call(
        _apply_kernel,
        out_shape=(jax.ShapeDtypeStruct((bc, hw), xr.dtype),
                   jax.ShapeDtypeStruct((bc, hw), xr.dtype)),
        grid=(n_bc, n_hw),
        in_specs=[pl.BlockSpec((sb, t), lambda i, h: (i, h)),
                  pl.BlockSpec((sb, t), lambda i, h: (i, h)),
                  pl.BlockSpec((sb, 1), lambda i, h: (i, 0)),    # mask: resident
                  pl.BlockSpec((sb, 1), lambda i, h: (i, 0))],
        out_specs=(pl.BlockSpec((sb, t), lambda i, h: (i, h)),
                   pl.BlockSpec((sb, t), lambda i, h: (i, h))),
        compiler_params=pltpu.CompilerParams(
            dimension_semantics=("parallel", "parallel"),
            vmem_limit_bytes=_VMEM_LIMIT),
        cost_estimate=apply_cost,
    )(xr_f, xi_f, mask_r, mask_i)

    return out_r.reshape(B, C, H, W), out_i.reshape(B, C, H, W)


# --------------------------------------------------------------------------- #
# Pure-JAX reference (mirrors the PyTorch forward) for the correctness check.
# --------------------------------------------------------------------------- #
def _reference(xr, xi, params):
    wdr, wdi, bdr, bdi, wur, wui, bur, bui = params
    x = xr + 1j * xi                                              # (B, C, H, W)
    p = jnp.mean(x, axis=(2, 3))                                  # avg pool -> (B, C)
    wd = wdr + 1j * wdi
    d = p @ wd.T + (bdr + 1j * bdi)                               # conv_down
    d = jnp.maximum(d.real, 0.0) + 1j * jnp.maximum(d.imag, 0.0)  # CReLU
    wu = wur + 1j * wui
    a = d @ wu.T + (bur + 1j * bui)                               # conv_up
    mag = jnp.abs(a)
    mask = jax.nn.sigmoid(mag) * a / mag                          # ComplexRatioMask
    out = x * mask[:, :, None, None]
    return jnp.real(out), jnp.imag(out)


if __name__ == "__main__":
    B, C, H, W = 2, 4, 16, 16
    r = 2
    Cr = C // r

    key = jax.random.PRNGKey(0)
    kxr, kxi, k1, k2, k3, k4, k5, k6, k7, k8 = jax.random.split(key, 10)

    xr = jax.random.normal(kxr, (B, C, H, W), jnp.float32)
    xi = jax.random.normal(kxi, (B, C, H, W), jnp.float32)

    # Complex 1x1-conv parameters: weight (out, in), bias (out,)
    s = 0.5
    params = (
        s * jax.random.normal(k1, (Cr, C), jnp.float32),   # conv_down weight (real)
        s * jax.random.normal(k2, (Cr, C), jnp.float32),   # conv_down weight (imag)
        s * jax.random.normal(k3, (Cr,), jnp.float32),     # conv_down bias (real)
        s * jax.random.normal(k4, (Cr,), jnp.float32),     # conv_down bias (imag)
        s * jax.random.normal(k5, (C, Cr), jnp.float32),   # conv_up weight (real)
        s * jax.random.normal(k6, (C, Cr), jnp.float32),   # conv_up weight (imag)
        s * jax.random.normal(k7, (C,), jnp.float32),      # conv_up bias (real)
        s * jax.random.normal(k8, (C,), jnp.float32),      # conv_up bias (imag)
    )

    out_r, out_i = cv_masked_channel_attention(xr, xi, params)
    jax.block_until_ready((out_r, out_i))

    ref_r, ref_i = _reference(xr, xi, params)
    assert jnp.allclose(out_r, ref_r, atol=1e-4, rtol=1e-4), "real part mismatch"
    assert jnp.allclose(out_i, ref_i, atol=1e-4, rtol=1e-4), "imag part mismatch"

    print("KERNEL_OK")
</pallas_src>

<mosaic_0001>
module attributes {stable_mosaic.version = 11 : i64} {
  func.func @_pool_kernel(%arg0: i32, %arg1: i32, %arg2: memref<8x256xf32, #tpu.memory_space<vmem>>, %arg3: memref<8x256xf32, #tpu.memory_space<vmem>>, %arg4: memref<8x1xf32, #tpu.memory_space<vmem>>, %arg5: memref<8x1xf32, #tpu.memory_space<vmem>>) attributes {dimension_semantics = [#tpu.dimension_semantics<parallel>, #tpu.dimension_semantics<arbitrary>], iteration_bounds = array<i64: 1, 1>, scalar_prefetch = 0 : i64, scratch_operands = 0 : i64, tpu.core_type = #tpu.core_type<tc>, window_params = [{transform_indices = @transform_0, window_bounds = array<i64: 8, 256>}, {transform_indices = @transform_1, window_bounds = array<i64: 8, 256>}, {transform_indices = @transform_2, window_bounds = array<i64: 8, 1>}, {transform_indices = @transform_3, window_bounds = array<i64: 8, 1>}]} {
    %c0_i32 = arith.constant 0 : i32
    %0 = arith.cmpi eq, %arg1, %c0_i32 : i32
    %1 = arith.extui %0 : i1 to i32
    %c0_i32_0 = arith.constant 0 : i32
    %2 = arith.cmpi ne, %1, %c0_i32_0 : i32
    scf.if %2 {
      %cst_16 = arith.constant 0.000000e+00 : f32
      %24 = vector.broadcast %cst_16 : f32 to vector<8x1xf32>
      %c0_17 = arith.constant 0 : index
      %c0_18 = arith.constant 0 : index
      %25 = vector.load %arg4[%c0_17, %c0_18] : memref<8x1xf32, #tpu.memory_space<vmem>>, vector<8x1xf32>
      tpu.vector_store %arg4[%c0_17, %c0_18], %24 {strides = array<i32>} : memref<8x1xf32, #tpu.memory_space<vmem>>, vector<8x1xf32>,
      %cst_19 = arith.constant 0.000000e+00 : f32
      %26 = vector.broadcast %cst_19 : f32 to vector<8x1xf32>
      %c0_20 = arith.constant 0 : index
      %c0_21 = arith.constant 0 : index
      %27 = vector.load %arg5[%c0_20, %c0_21] : memref<8x1xf32, #tpu.memory_space<vmem>>, vector<8x1xf32>
      tpu.vector_store %arg5[%c0_20, %c0_21], %26 {strides = array<i32>} : memref<8x1xf32, #tpu.memory_space<vmem>>, vector<8x1xf32>,
    } else {
    }
    %3 = tpu.iota {dimensions = array<i32: 1>} : vector<8x256xi32>
    %c256_i32 = arith.constant 256 : i32
    %4 = arith.muli %arg1, %c256_i32 : i32
    %c256_i32_1 = arith.constant 256 : i32
    %5 = arith.subi %c256_i32_1, %4 : i32
    %6 = vector.broadcast %5 : i32 to vector<8x256xi32>
    %7 = arith.cmpi slt, %3, %6 : vector<8x256xi32>
    %c0 = arith.constant 0 : index
    %c0_2 = arith.constant 0 : index
    %8 = vector.load %arg2[%c0, %c0_2] : memref<8x256xf32, #tpu.memory_space<vmem>>, vector<8x256xf32>
    %cst = arith.constant 0.000000e+00 : f32
    %9 = vector.broadcast %cst : f32 to vector<8x256xf32>
    %10 = arith.select %7, %8, %9 : vector<8x256xi1>, vector<8x256xf32>
    %c0_3 = arith.constant 0 : index
    %c0_4 = arith.constant 0 : index
    %11 = vector.load %arg3[%c0_3, %c0_4] : memref<8x256xf32, #tpu.memory_space<vmem>>, vector<8x256xf32>
    %cst_5 = arith.constant 0.000000e+00 : f32
    %12 = vector.broadcast %cst_5 : f32 to vector<8x256xf32>
    %13 = arith.select %7, %11, %12 : vector<8x256xi1>, vector<8x256xf32>
    %c0_6 = arith.constant 0 : index
    %c0_7 = arith.constant 0 : index
    %14 = vector.load %arg4[%c0_6, %c0_7] : memref<8x1xf32, #tpu.memory_space<vmem>>, vector<8x1xf32>
    %cst_8 = arith.constant dense<0.000000e+00> : vector<8xf32>
    %15 = vector.multi_reduction <add>, %10, %cst_8 [1] : vector<8x256xf32> to vector<8xf32>
    %16 = vector.shape_cast %15 : vector<8xf32> to vector<8x1xf32>
    %17 = arith.addf %14, %16 : vector<8x1xf32>
    %c0_9 = arith.constant 0 : index
    %c0_10 = arith.constant 0 : index
    %18 = vector.load %arg4[%c0_9, %c0_10] : memref<8x1xf32, #tpu.memory_space<vmem>>, vector<8x1xf32>
    tpu.vector_store %arg4[%c0_9, %c0_10], %17 {strides = array<i32>} : memref<8x1xf32, #tpu.memory_space<vmem>>, vector<8x1xf32>,
    %c0_11 = arith.constant 0 : index
    %c0_12 = arith.constant 0 : index
    %19 = vector.load %arg5[%c0_11, %c0_12] : memref<8x1xf32, #tpu.memory_space<vmem>>, vector<8x1xf32>
    %cst_13 = arith.constant dense<0.000000e+00> : vector<8xf32>
    %20 = vector.multi_reduction <add>, %13, %cst_13 [1] : vector<8x256xf32> to vector<8xf32>
    %21 = vector.shape_cast %20 : vector<8xf32> to vector<8x1xf32>
    %22 = arith.addf %19, %21 : vector<8x1xf32>
    %c0_14 = arith.constant 0 : index
    %c0_15 = arith.constant 0 : index
    %23 = vector.load %arg5[%c0_14, %c0_15] : memref<8x1xf32, #tpu.memory_space<vmem>>, vector<8x1xf32>
    tpu.vector_store %arg5[%c0_14, %c0_15], %22 {strides = array<i32>} : memref<8x1xf32, #tpu.memory_space<vmem>>, vector<8x1xf32>,
    return
  }
  func.func @transform_0(%arg0: i32, %arg1: i32) -> (i32, i32) {
    %c0_i32 = arith.constant 0 : i32
    return %arg0, %arg1 : i32, i32
  }
  func.func @transform_1(%arg0: i32, %arg1: i32) -> (i32, i32) {
    %c0_i32 = arith.constant 0 : i32
    return %arg0, %arg1 : i32, i32
  }
  func.func @transform_2(%arg0: i32, %arg1: i32) -> (i32, i32) {
    %c0_i32 = arith.constant 0 : i32
    %c0_i32_0 = arith.constant 0 : i32
    return %arg0, %c0_i32 : i32, i32
  }
  func.func @transform_3(%arg0: i32, %arg1: i32) -> (i32, i32) {
    %c0_i32 = arith.constant 0 : i32
    %c0_i32_0 = arith.constant 0 : i32
    return %arg0, %c0_i32 : i32, i32
  }
}

module attributes {stable_mosaic.version = 11 : i64} {
  func.func @_apply_kernel(%arg0: i32, %arg1: i32, %arg2: memref<8x256xf32, #tpu.memory_space<vmem>>, %arg3: memref<8x256xf32, #tpu.memory_space<vmem>>, %arg4: memref<8x1xf32, #tpu.memory_space<vmem>>, %arg5: memref<8x1xf32, #tpu.memory_space<vmem>>, %arg6: memref<8x256xf32, #tpu.memory_space<vmem>>, %arg7: memref<8x256xf32, #tpu.memory_space<vmem>>) attributes {dimension_semantics = [#tpu.dimension_semantics<parallel>, #tpu.dimension_semantics<parallel>], iteration_bounds = array<i64: 1, 1>, scalar_prefetch = 0 : i64, scratch_operands = 0 : i64, tpu.core_type = #tpu.core_type<tc>, window_params = [{transform_indices = @transform_0, window_bounds = array<i64: 8, 256>}, {transform_indices = @transform_1, window_bounds = array<i64: 8, 256>}, {transform_indices = @transform_2, window_bounds = array<i64: 8, 1>}, {transform_indices = @transform_3, window_bounds = array<i64: 8, 1>}, {transform_indices = @transform_4, window_bounds = array<i64: 8, 256>}, {transform_indices = @transform_5, window_bounds = array<i64: 8, 256>}]} {
    %c0 = arith.constant 0 : index
    %c0_0 = arith.constant 0 : index
    %0 = vector.load %arg2[%c0, %c0_0] : memref<8x256xf32, #tpu.memory_space<vmem>>, vector<8x256xf32>
    %c0_1 = arith.constant 0 : index
    %c0_2 = arith.constant 0 : index
    %1 = vector.load %arg3[%c0_1, %c0_2] : memref<8x256xf32, #tpu.memory_space<vmem>>, vector<8x256xf32>
    %c0_3 = arith.constant 0 : index
    %c0_4 = arith.constant 0 : index
    %2 = vector.load %arg4[%c0_3, %c0_4] : memref<8x1xf32, #tpu.memory_space<vmem>>, vector<8x1xf32>
    %c0_5 = arith.constant 0 : index
    %c0_6 = arith.constant 0 : index
    %3 = vector.load %arg5[%c0_5, %c0_6] : memref<8x1xf32, #tpu.memory_space<vmem>>, vector<8x1xf32>
    %4 = vector.broadcast %2 : vector<8x1xf32> to vector<8x256xf32>
    %5 = arith.mulf %0, %4 : vector<8x256xf32>
    %6 = vector.broadcast %3 : vector<8x1xf32> to vector<8x256xf32>
    %7 = arith.mulf %1, %6 : vector<8x256xf32>
    %8 = arith.subf %5, %7 : vector<8x256xf32>
    %c0_7 = arith.constant 0 : index
    %c0_8 = arith.constant 0 : index
    %9 = vector.load %arg6[%c0_7, %c0_8] : memref<8x256xf32, #tpu.memory_space<vmem>>, vector<8x256xf32>
    tpu.vector_store %arg6[%c0_7, %c0_8], %8 {strides = array<i32>} : memref<8x256xf32, #tpu.memory_space<vmem>>, vector<8x256xf32>,
    %10 = vector.broadcast %3 : vector<8x1xf32> to vector<8x256xf32>
    %11 = arith.mulf %0, %10 : vector<8x256xf32>
    %12 = vector.broadcast %2 : vector<8x1xf32> to vector<8x256xf32>
    %13 = arith.mulf %1, %12 : vector<8x256xf32>
    %14 = arith.addf %11, %13 : vector<8x256xf32>
    %c0_9 = arith.constant 0 : index
    %c0_10 = arith.constant 0 : index
    %15 = vector.load %arg7[%c0_9, %c0_10] : memref<8x256xf32, #tpu.memory_space<vmem>>, vector<8x256xf32>
    tpu.vector_store %arg7[%c0_9, %c0_10], %14 {strides = array<i32>} : memref<8x256xf32, #tpu.memory_space<vmem>>, vector<8x256xf32>,
    return
  }
  func.func @transform_0(%arg0: i32, %arg1: i32) -> (i32, i32) {
    %c0_i32 = arith.constant 0 : i32
    return %arg0, %arg1 : i32, i32
  }
  func.func @transform_1(%arg0: i32, %arg1: i32) -> (i32, i32) {
    %c0_i32 = arith.constant 0 : i32
    return %arg0, %arg1 : i32, i32
  }
  func.func @transform_2(%arg0: i32, %arg1: i32) -> (i32, i32) {
    %c0_i32 = arith.constant 0 : i32
    %c0_i32_0 = arith.constant 0 : i32
    return %arg0, %c0_i32 : i32, i32
  }
  func.func @transform_3(%arg0: i32, %arg1: i32) -> (i32, i32) {
    %c0_i32 = arith.constant 0 : i32
    %c0_i32_0 = arith.constant 0 : i32
    return %arg0, %c0_i32 : i32, i32
  }
  func.func @transform_4(%arg0: i32, %arg1: i32) -> (i32, i32) {
    %c0_i32 = arith.constant 0 : i32
    return %arg0, %arg1 : i32, i32
  }
  func.func @transform_5(%arg0: i32, %arg1: i32) -> (i32, i32) {
    %c0_i32 = arith.constant 0 : i32
    return %arg0, %arg1 : i32, i32
  }
}

</mosaic_0001>

<llo_original>
// kernel: cv_masked_channel_attention.3
$region0: #{cv_masked_channel_attention.3}
  #allocation0 [shape = 'u32[]', space=smem, size = 0x4, offset = 0x4, fixed_abs, tag = 'smem constant byte address 0x4 - core index']
  #allocation1 [shape = 'u32[72,128]{1,0:T(1,128)}', space=vmem, size = 0x9000, scoped, tag = 'internal scratch']
  %s0 = inlined_call_operand.vmem [shape: f32[8,256], index: 0, kind: input, shape index: {}]
  %s1 = inlined_call_operand.vmem [shape: f32[8,256], index: 1, kind: input, shape index: {}]
  %s2 = inlined_call_operand.vmem [shape: f32[8,1], index: 2, kind: input, shape index: {}]
  %s3 = inlined_call_operand.vmem [shape: f32[8,1], index: 3, kind: input, shape index: {}]
  %s4 = inlined_call_operand.vmem [shape: f32[8,256], index: 4, kind: output, shape index: {0}]
  %s5 = inlined_call_operand.vmem [shape: f32[8,256], index: 5, kind: output, shape index: {1}]
  %6 = xla_tuple %s4, %s5
  %s7 = sld [smem:[#allocation0]]
  $region34: #{cv_masked_channel_attention.3} parent=0
    _
  %s9 = ssub.s32 1, %s7
  %s10 = scalar_select 0, %s9, %s7
  // Predicated region
  $region2: #{cv_masked_channel_attention.3} parent=0 // pred_check
    _
  $region3: #{cv_masked_channel_attention.3} parent=0 // pred_check_branch
    %12 = sbr.rel (0) target = $region5
  $region4: #{cv_masked_channel_attention.3} parent=0 // pred_region
    _
  $region5: #{cv_masked_channel_attention.3} parent=0 // pred_fallthru
    _
  // Predicated region
  $region6: #{cv_masked_channel_attention.3} parent=0 // pred_check
    _
  $region7: #{cv_masked_channel_attention.3} parent=0 // pred_check_branch
    %14 = sbr.rel (0) target = $region9
  $region8: #{cv_masked_channel_attention.3} parent=0 // pred_region
    _
  $region9: #{cv_masked_channel_attention.3} parent=0 // pred_fallthru
    _
  // Predicated region
  $region10: #{cv_masked_channel_attention.3} parent=0 // pred_check
    _
  $region11: #{cv_masked_channel_attention.3} parent=0 // pred_check_branch
    %16 = sbr.rel (0) target = $region13
  $region12: #{cv_masked_channel_attention.3} parent=0 // pred_region
    _
  $region13: #{cv_masked_channel_attention.3} parent=0 // pred_fallthru
    _
  // Predicated region
  $region14: #{cv_masked_channel_attention.3} parent=0 // pred_check
    _
  $region15: #{cv_masked_channel_attention.3} parent=0 // pred_check_branch
    %18 = sbr.rel (0) target = $region17
  $region16: #{cv_masked_channel_attention.3} parent=0 // pred_region
    _
  $region17: #{cv_masked_channel_attention.3} parent=0 // pred_fallthru
    _
  %v19 = vld [vmem:[%s0] sm:$0xff]
  %v20 = vld [vmem:[%s0 + $0x8] sm:$0xff]
  %v21 = vld [vmem:[%s1] sm:$0xff]
  %v22 = vld [vmem:[%s1 + $0x8] sm:$0xff]
  %v23 = vld [vmem:[%s2] sm:$0xff]
  %v24 = vld [vmem:[%s3] sm:$0xff]
  %26 = vset.pattern.permute.xlu0 0
  %27 = vperm.xlu0 %26, %v23
  %v28 = vpop.permute.xlu0 %27
  %v30 = vmul.f32 %v19, %v28
  %v31 = vmul.f32 %v20, %v28
  %33 = vset.pattern.permute.xlu0 0
  %34 = vperm.xlu0 %33, %v24
  %v35 = vpop.permute.xlu0 %34
  %v37 = vmul.f32 %v21, %v35
  %v38 = vmul.f32 %v22, %v35
  %v39 = vsub.f32 %v30, %v37
  %v40 = vsub.f32 %v31, %v38
  %41 = vst [vmem:[%s4] sm:$0xff] %v39
  %42 = vst [vmem:[%s4 + $0x8] sm:$0xff] %v40
  %v43 = vmul.f32 %v19, %v35
  %v44 = vmul.f32 %v20, %v35
  %v45 = vmul.f32 %v21, %v28
  %v46 = vmul.f32 %v22, %v28
  %v47 = vadd.f32 %v43, %v45
  %v48 = vadd.f32 %v44, %v46
  %49 = vst [vmem:[%s5] sm:$0xff] %v47
  %50 = vst [vmem:[%s5 + $0x8] sm:$0xff] %v48
  // Predicated region
  $region18: #{cv_masked_channel_attention.3} parent=0 // pred_check
    _
  $region19: #{cv_masked_channel_attention.3} parent=0 // pred_check_branch
    %52 = sbr.rel (0) target = $region21
  $region20: #{cv_masked_channel_attention.3} parent=0 // pred_region
    _
  $region21: #{cv_masked_channel_attention.3} parent=0 // pred_fallthru
    _
  // Predicated region
  $region22: #{cv_masked_channel_attention.3} parent=0 // pred_check
    _
  $region23: #{cv_masked_channel_attention.3} parent=0 // pred_check_branch
    %54 = sbr.rel (0) target = $region25
  $region24: #{cv_masked_channel_attention.3} parent=0 // pred_region
    _
  $region25: #{cv_masked_channel_attention.3} parent=0 // pred_fallthru
    _
  // Predicated region
  $region26: #{cv_masked_channel_attention.3} parent=0 // pred_check
    _
  $region27: #{cv_masked_channel_attention.3} parent=0 // pred_check_branch
    %56 = sbr.rel (0) target = $region29
  $region28: #{cv_masked_channel_attention.3} parent=0 // pred_region
    _
  $region29: #{cv_masked_channel_attention.3} parent=0 // pred_fallthru
    _
  // Predicated region
  $region30: #{cv_masked_channel_attention.3} parent=0 // pred_check
    _
  $region31: #{cv_masked_channel_attention.3} parent=0 // pred_check_branch
    %58 = sbr.rel (0) target = $region33
  $region32: #{cv_masked_channel_attention.3} parent=0 // pred_region
    _
  $region33: #{cv_masked_channel_attention.3} parent=0 // pred_fallthru
    _

// kernel: cv_masked_channel_attention.2
$region0: #{cv_masked_channel_attention.2}
  #allocation0 [shape = 'u32[]', space=smem, size = 0x4, offset = 0x4, fixed_abs, tag = 'smem constant byte address 0x4 - core index']
  #allocation1 [shape = 'u32[72,128]{1,0:T(1,128)}', space=vmem, size = 0x9000, scoped, tag = 'internal scratch']
  %s0 = inlined_call_operand.vmem [shape: f32[8,256], index: 0, kind: input, shape index: {}]
  %s1 = inlined_call_operand.vmem [shape: f32[8,256], index: 1, kind: input, shape index: {}]
  %s2 = inlined_call_operand.vmem [shape: f32[8,1], index: 2, kind: output, shape index: {0}]
  %s3 = inlined_call_operand.vmem [shape: f32[8,1], index: 3, kind: output, shape index: {1}]
  %4 = xla_tuple %s2, %s3
  %s5 = sld [smem:[#allocation0]]
  $region30: #{cv_masked_channel_attention.2} parent=0
    _
  %s7 = ssub.s32 1, %s5
  %s8 = scalar_select 0, %s7, %s5
  // Predicated region
  $region2: #{cv_masked_channel_attention.2} parent=0 // pred_check
    _
  $region3: #{cv_masked_channel_attention.2} parent=0 // pred_check_branch
    %10 = sbr.rel (0) target = $region5
  $region4: #{cv_masked_channel_attention.2} parent=0 // pred_region
    _
  $region5: #{cv_masked_channel_attention.2} parent=0 // pred_fallthru
    _
  // Predicated region
  $region6: #{cv_masked_channel_attention.2} parent=0 // pred_check
    _
  $region7: #{cv_masked_channel_attention.2} parent=0 // pred_check_branch
    %12 = sbr.rel (0) target = $region9
  $region8: #{cv_masked_channel_attention.2} parent=0 // pred_region
    _
  $region9: #{cv_masked_channel_attention.2} parent=0 // pred_fallthru
    _
  %p13 = scmp.eq.s32.totalorder 0, 0
  // Predicated region
  $region10: #{cv_masked_channel_attention.2} parent=0 // pred_check
    %p14 = pneg %p13
  $region11: #{cv_masked_channel_attention.2} parent=0 // pred_check_branch
    %16 = sbr.rel (%p14) target = $region13
  $region12: #{cv_masked_channel_attention.2} parent=0 // pred_region
    %vm17 = vcmask 7168
    %18 = vst.msk [vmem:[%s2] sm:$0xff] %vm17, 0.0
    %19 = vst.msk [vmem:[%s3] sm:$0xff] %vm17, 0.0
  $region13: #{cv_masked_channel_attention.2} parent=0 // pred_fallthru
    _
  %v20 = vlaneseq
  %v21 = vand.u32 %v20, 127
  %v22 = vadd.s32 %v21, 128
  %s23 = smul.u32 0, 256
  %s24 = ssub.s32 256, %s23
  %v25 = vstv %s24
  %vm26 = vcmp.lt.s32.totalorder %v21, %v25
  %vm27 = vcmp.lt.s32.totalorder %v22, %v25
  %v28 = vld [vmem:[%s0] sm:$0xff]
  %v29 = vld [vmem:[%s0 + $0x8] sm:$0xff]
  %v30 = vsel %vm26, %v28, 0.0
  %v31 = vsel %vm27, %v29, 0.0
  %v32 = vld [vmem:[%s1] sm:$0xff]
  %v33 = vld [vmem:[%s1 + $0x8] sm:$0xff]
  %v34 = vsel %vm26, %v32, 0.0
  %v35 = vsel %vm27, %v33, 0.0
  %v36 = vld [vmem:[%s2] sm:$0xff]
  %v37 = vadd.f32 %v30, %v31
  %38 = vadd.xlane.f32.xlu0 %v37
  %v39 = vpop.xlane.xlu0 %38
  %v40 = vadd.f32 %v36, %v39
  %vm41 = vcmask 7168
  %42 = vst.msk [vmem:[%s2] sm:$0xff] %vm41, %v40
  %v43 = vld [vmem:[%s3] sm:$0xff]
  %v44 = vadd.f32 %v34, %v35
  %45 = vadd.xlane.f32.xlu0 %v44
  %v46 = vpop.xlane.xlu0 %45
  %v47 = vadd.f32 %v43, %v46
  %48 = vst.msk [vmem:[%s3] sm:$0xff] %vm41, %v47
  // Predicated region
  $region14: #{cv_masked_channel_attention.2} parent=0 // pred_check
    _
  $region15: #{cv_masked_channel_attention.2} parent=0 // pred_check_branch
    %50 = sbr.rel (0) target = $region17
  $region16: #{cv_masked_channel_attention.2} parent=0 // pred_region
    _
  $region17: #{cv_masked_channel_attention.2} parent=0 // pred_fallthru
    _
  // Predicated region
  $region18: #{cv_masked_channel_attention.2} parent=0 // pred_check
    _
  $region19: #{cv_masked_channel_attention.2} parent=0 // pred_check_branch
    %52 = sbr.rel (0) target = $region21
  $region20: #{cv_masked_channel_attention.2} parent=0 // pred_region
    _
  $region21: #{cv_masked_channel_attention.2} parent=0 // pred_fallthru
    _
  // Predicated region
  $region22: #{cv_masked_channel_attention.2} parent=0 // pred_check
    _
  $region23: #{cv_masked_channel_attention.2} parent=0 // pred_check_branch
    %54 = sbr.rel (0) target = $region25
  $region24: #{cv_masked_channel_attention.2} parent=0 // pred_region
    _
  $region25: #{cv_masked_channel_attention.2} parent=0 // pred_fallthru
    _
  // Predicated region
  $region26: #{cv_masked_channel_attention.2} parent=0 // pred_check
    _
  $region27: #{cv_masked_channel_attention.2} parent=0 // pred_check_branch
    %56 = sbr.rel (0) target = $region29
  $region28: #{cv_masked_channel_attention.2} parent=0 // pred_region
    _
  $region29: #{cv_masked_channel_attention.2} parent=0 // pred_fallthru
    _

</llo_original>
